<compile_context>
chip_gen: v7x
topology: tpu7x:2x2x1
jax: 0.10.0
libtpu: 0.0.40
codegen_flags: <defaults>
</compile_context>

<pallas_src>
import jax
import jax.numpy as jnp
from jax.experimental import pallas as pl
from jax.experimental.pallas import tpu as pltpu

BN_EPS = 1e-5


def _reward_kernel(
    x_ref,
    w1_ref, g1_ref, be1_ref,
    w2_ref, g2_ref, be2_ref,
    w3_ref, g3_ref, be3_ref,
    w4_ref, b4_ref,
    o_ref,
):
    """Whole forward pass in one kernel (everything resident in VMEM)."""

    def linear_bn_relu(h, w_ref, g_ref, be_ref):
        # Linear (pre-BN bias intentionally omitted: cancels in z - mean(z)).
        w = w_ref[...].astype(jnp.float32)  # bf16 weights -> fp32 for MXU/BN math
        z = jnp.dot(h, w, preferred_element_type=jnp.float32)
        # BatchNorm1d training-mode batch stats, biased variance, one-pass var.
        mu = jnp.mean(z, axis=0, keepdims=True)
        var = jnp.maximum(jnp.mean(z * z, axis=0, keepdims=True) - mu * mu, 0.0)
        scale = g_ref[...] * jax.lax.rsqrt(var + BN_EPS)  # gamma folded into rsqrt (EUP)
        zn = (z - mu) * scale + be_ref[...]
        # ReLU
        return jnp.maximum(zn, 0.0)

    h = x_ref[...].astype(jnp.float32)
    h = linear_bn_relu(h, w1_ref, g1_ref, be1_ref)
    h = linear_bn_relu(h, w2_ref, g2_ref, be2_ref)
    h = linear_bn_relu(h, w3_ref, g3_ref, be3_ref)
    # Final Linear(64 -> 1) + Tanh as a lane multiply + cross-lane reduce
    # (avoids an N=1 MXU matmul and its push/drain latency on the tail).
    z = jnp.sum(h * w4_ref[...], axis=-1, keepdims=True) + b4_ref[...]
    o_ref[...] = jnp.tanh(z).astype(o_ref.dtype)


@jax.jit
def reward_forward(x, params):
    """x: [batch, input_dim] float32 -> [batch, 1] float32."""
    batch = x.shape[0]
    vmem = pl.BlockSpec(memory_space=pltpu.MemorySpace.VMEM)
    args = (
        x,
        params["w1"], params["g1"], params["be1"],
        params["w2"], params["g2"], params["be2"],
        params["w3"], params["g3"], params["be3"],
        params["w4"], params["b4"],
    )
    return pl.pallas_call(
        _reward_kernel,
        out_shape=jax.ShapeDtypeStruct((batch, 1), jnp.float32),
        in_specs=[vmem] * len(args),
        out_specs=vmem,
        # Explicit VMEM budget: safe on v5e/v6e (128 MiB) and within v7x's 64 MiB.
        compiler_params=pltpu.CompilerParams(vmem_limit_bytes=32 * 1024 * 1024),
    )(*args)


def init_params(key, input_dim):
    """PyTorch-style uniform(-1/sqrt(fan_in), +) init.

    w1..w3 are stored bf16 (bandwidth), everything else fp32.  b1..b3 exist
    only so the reference can include them (they cancel inside BatchNorm).
    """
    dims = [(input_dim, 512), (512, 256), (256, 64), (64, 1)]
    params = {}
    for i, (fi, fo) in enumerate(dims, start=1):
        key, kw, kb = jax.random.split(key, 3)
        bound = 1.0 / jnp.sqrt(jnp.float32(fi))
        w = jax.random.uniform(kw, (fi, fo), jnp.float32, minval=-bound, maxval=bound)
        b = jax.random.uniform(kb, (1, fo), jnp.float32, minval=-bound, maxval=bound)
        if i <= 3:
            params[f"w{i}"] = w.astype(jnp.bfloat16)  # hidden-layer weights in bf16
            params[f"b{i}"] = b                       # reference-only (cancels in BN)
            params[f"g{i}"] = jnp.ones((1, fo), jnp.float32)
            params[f"be{i}"] = jnp.zeros((1, fo), jnp.float32)
        else:
            params["w4"] = w.T                         # [1, 64] row for lane reduce
            params["b4"] = b                           # [1, 1]
    return params


def reward_reference(x, params):
    """Pure-JAX reference mirroring the PyTorch module (biases included)."""
    h = x
    for i in range(1, 4):
        w = params[f"w{i}"].astype(jnp.float32)
        z = h @ w + params[f"b{i}"]
        mu = jnp.mean(z, axis=0, keepdims=True)
        var = jnp.mean((z - mu) ** 2, axis=0, keepdims=True)
        z = (z - mu) / jnp.sqrt(var + BN_EPS)
        z = z * params[f"g{i}"] + params[f"be{i}"]
        h = jnp.maximum(z, 0.0)
    return jnp.tanh(h @ params["w4"].T + params["b4"])


if __name__ == "__main__":
    key = jax.random.PRNGKey(0)
    k_x, k_p = jax.random.split(key)

    batch, input_dim = 8, 32
    x = jax.random.normal(k_x, (batch, input_dim), jnp.float32)
    params = init_params(k_p, input_dim)

    out = reward_forward(x, params)
    out = jax.block_until_ready(out)

    ref = reward_reference(x, params)
    assert out.shape == (batch, 1), out.shape
    # Slightly looser than 1e-5: kernel uses one-pass variance / rsqrt / folded
    # gamma / dropped (cancelling) pre-BN biases vs. the literal reference.
    assert jnp.allclose(out, ref, atol=5e-5, rtol=5e-5), (out, ref)

    # TODO(synk): save/load_checkpoint and the Adam optimizer are host-side
    # training utilities, not part of the forward pass; not translated.
    print("KERNEL_OK")
</pallas_src>

<mosaic_0001>
module attributes {stable_mosaic.version = 11 : i64} {
  func.func @_reward_kernel(%arg0: memref<8x32xf32, #tpu.memory_space<vmem>>, %arg1: memref<32x512xbf16, #tpu.memory_space<vmem>>, %arg2: memref<1x512xf32, #tpu.memory_space<vmem>>, %arg3: memref<1x512xf32, #tpu.memory_space<vmem>>, %arg4: memref<512x256xbf16, #tpu.memory_space<vmem>>, %arg5: memref<1x256xf32, #tpu.memory_space<vmem>>, %arg6: memref<1x256xf32, #tpu.memory_space<vmem>>, %arg7: memref<256x64xbf16, #tpu.memory_space<vmem>>, %arg8: memref<1x64xf32, #tpu.memory_space<vmem>>, %arg9: memref<1x64xf32, #tpu.memory_space<vmem>>, %arg10: memref<1x64xf32, #tpu.memory_space<vmem>>, %arg11: memref<1x1xf32, #tpu.memory_space<vmem>>, %arg12: memref<8x1xf32, #tpu.memory_space<vmem>>) attributes {dimension_semantics = [], scalar_prefetch = 0 : i64, scratch_operands = 0 : i64, tpu.core_type = #tpu.core_type<tc>} {
    %c0 = arith.constant 0 : index
    %c0_0 = arith.constant 0 : index
    %0 = vector.load %arg0[%c0, %c0_0] : memref<8x32xf32, #tpu.memory_space<vmem>>, vector<8x32xf32>
    %c0_1 = arith.constant 0 : index
    %c0_2 = arith.constant 0 : index
    %1 = vector.load %arg1[%c0_1, %c0_2] : memref<32x512xbf16, #tpu.memory_space<vmem>>, vector<32x512xbf16>
    %2 = arith.extf %1 : vector<32x512xbf16> to vector<32x512xf32>
    %cst = arith.constant dense<0.000000e+00> : vector<8x512xf32>
    %3 = tpu.matmul %0, %2, %cst {dimension_numbers = #tpu.dot_dimension_numbers<[1], [0], [0], [1], [0, 0, 1, 1], [], []>} : vector<8x32xf32>, vector<32x512xf32>, vector<8x512xf32> -> vector<8x512xf32>
    %cst_3 = arith.constant dense<0.000000e+00> : vector<512xf32>
    %4 = vector.multi_reduction <add>, %3, %cst_3 [0] : vector<8x512xf32> to vector<512xf32>
    %5 = vector.shape_cast %4 : vector<512xf32> to vector<1x512xf32>
    %cst_4 = arith.constant 8.000000e+00 : f32
    %6 = vector.broadcast %cst_4 : f32 to vector<1x512xf32>
    %7 = arith.divf %5, %6 : vector<1x512xf32>
    %8 = arith.mulf %3, %3 : vector<8x512xf32>
    %cst_5 = arith.constant dense<0.000000e+00> : vector<512xf32>
    %9 = vector.multi_reduction <add>, %8, %cst_5 [0] : vector<8x512xf32> to vector<512xf32>
    %10 = vector.shape_cast %9 : vector<512xf32> to vector<1x512xf32>
    %cst_6 = arith.constant 8.000000e+00 : f32
    %11 = vector.broadcast %cst_6 : f32 to vector<1x512xf32>
    %12 = arith.divf %10, %11 : vector<1x512xf32>
    %13 = arith.mulf %7, %7 : vector<1x512xf32>
    %14 = arith.subf %12, %13 : vector<1x512xf32>
    %cst_7 = arith.constant 0.000000e+00 : f32
    %15 = vector.broadcast %cst_7 : f32 to vector<1x512xf32>
    %16 = arith.maximumf %14, %15 : vector<1x512xf32>
    %c0_8 = arith.constant 0 : index
    %c0_9 = arith.constant 0 : index
    %17 = vector.load %arg2[%c0_8, %c0_9] : memref<1x512xf32, #tpu.memory_space<vmem>>, vector<1x512xf32>
    %cst_10 = arith.constant 9.99999974E-6 : f32
    %18 = vector.broadcast %cst_10 : f32 to vector<1x512xf32>
    %19 = arith.addf %16, %18 : vector<1x512xf32>
    %20 = math.rsqrt %19 : vector<1x512xf32>
    %21 = arith.mulf %17, %20 : vector<1x512xf32>
    %22 = vector.broadcast %7 : vector<1x512xf32> to vector<8x512xf32>
    %23 = arith.subf %3, %22 : vector<8x512xf32>
    %24 = vector.broadcast %21 : vector<1x512xf32> to vector<8x512xf32>
    %25 = arith.mulf %23, %24 : vector<8x512xf32>
    %c0_11 = arith.constant 0 : index
    %c0_12 = arith.constant 0 : index
    %26 = vector.load %arg3[%c0_11, %c0_12] : memref<1x512xf32, #tpu.memory_space<vmem>>, vector<1x512xf32>
    %27 = vector.broadcast %26 : vector<1x512xf32> to vector<8x512xf32>
    %28 = arith.addf %25, %27 : vector<8x512xf32>
    %cst_13 = arith.constant 0.000000e+00 : f32
    %29 = vector.broadcast %cst_13 : f32 to vector<8x512xf32>
    %30 = arith.maximumf %28, %29 : vector<8x512xf32>
    %c0_14 = arith.constant 0 : index
    %c0_15 = arith.constant 0 : index
    %31 = vector.load %arg4[%c0_14, %c0_15] : memref<512x256xbf16, #tpu.memory_space<vmem>>, vector<512x256xbf16>
    %32 = arith.extf %31 : vector<512x256xbf16> to vector<512x256xf32>
    %cst_16 = arith.constant dense<0.000000e+00> : vector<8x256xf32>
    %33 = tpu.matmul %30, %32, %cst_16 {dimension_numbers = #tpu.dot_dimension_numbers<[1], [0], [0], [1], [0, 0, 1, 1], [], []>} : vector<8x512xf32>, vector<512x256xf32>, vector<8x256xf32> -> vector<8x256xf32>
    %cst_17 = arith.constant dense<0.000000e+00> : vector<256xf32>
    %34 = vector.multi_reduction <add>, %33, %cst_17 [0] : vector<8x256xf32> to vector<256xf32>
    %35 = vector.shape_cast %34 : vector<256xf32> to vector<1x256xf32>
    %cst_18 = arith.constant 8.000000e+00 : f32
    %36 = vector.broadcast %cst_18 : f32 to vector<1x256xf32>
    %37 = arith.divf %35, %36 : vector<1x256xf32>
    %38 = arith.mulf %33, %33 : vector<8x256xf32>
    %cst_19 = arith.constant dense<0.000000e+00> : vector<256xf32>
    %39 = vector.multi_reduction <add>, %38, %cst_19 [0] : vector<8x256xf32> to vector<256xf32>
    %40 = vector.shape_cast %39 : vector<256xf32> to vector<1x256xf32>
    %cst_20 = arith.constant 8.000000e+00 : f32
    %41 = vector.broadcast %cst_20 : f32 to vector<1x256xf32>
    %42 = arith.divf %40, %41 : vector<1x256xf32>
    %43 = arith.mulf %37, %37 : vector<1x256xf32>
    %44 = arith.subf %42, %43 : vector<1x256xf32>
    %cst_21 = arith.constant 0.000000e+00 : f32
    %45 = vector.broadcast %cst_21 : f32 to vector<1x256xf32>
    %46 = arith.maximumf %44, %45 : vector<1x256xf32>
    %c0_22 = arith.constant 0 : index
    %c0_23 = arith.constant 0 : index
    %47 = vector.load %arg5[%c0_22, %c0_23] : memref<1x256xf32, #tpu.memory_space<vmem>>, vector<1x256xf32>
    %cst_24 = arith.constant 9.99999974E-6 : f32
    %48 = vector.broadcast %cst_24 : f32 to vector<1x256xf32>
    %49 = arith.addf %46, %48 : vector<1x256xf32>
    %50 = math.rsqrt %49 : vector<1x256xf32>
    %51 = arith.mulf %47, %50 : vector<1x256xf32>
    %52 = vector.broadcast %37 : vector<1x256xf32> to vector<8x256xf32>
    %53 = arith.subf %33, %52 : vector<8x256xf32>
    %54 = vector.broadcast %51 : vector<1x256xf32> to vector<8x256xf32>
    %55 = arith.mulf %53, %54 : vector<8x256xf32>
    %c0_25 = arith.constant 0 : index
    %c0_26 = arith.constant 0 : index
    %56 = vector.load %arg6[%c0_25, %c0_26] : memref<1x256xf32, #tpu.memory_space<vmem>>, vector<1x256xf32>
    %57 = vector.broadcast %56 : vector<1x256xf32> to vector<8x256xf32>
    %58 = arith.addf %55, %57 : vector<8x256xf32>
    %cst_27 = arith.constant 0.000000e+00 : f32
    %59 = vector.broadcast %cst_27 : f32 to vector<8x256xf32>
    %60 = arith.maximumf %58, %59 : vector<8x256xf32>
    %c0_28 = arith.constant 0 : index
    %c0_29 = arith.constant 0 : index
    %61 = vector.load %arg7[%c0_28, %c0_29] : memref<256x64xbf16, #tpu.memory_space<vmem>>, vector<256x64xbf16>
    %62 = arith.extf %61 : vector<256x64xbf16> to vector<256x64xf32>
    %cst_30 = arith.constant dense<0.000000e+00> : vector<8x64xf32>
    %63 = tpu.matmul %60, %62, %cst_30 {dimension_numbers = #tpu.dot_dimension_numbers<[1], [0], [0], [1], [0, 0, 1, 1], [], []>} : vector<8x256xf32>, vector<256x64xf32>, vector<8x64xf32> -> vector<8x64xf32>
    %cst_31 = arith.constant dense<0.000000e+00> : vector<64xf32>
    %64 = vector.multi_reduction <add>, %63, %cst_31 [0] : vector<8x64xf32> to vector<64xf32>
    %65 = vector.shape_cast %64 : vector<64xf32> to vector<1x64xf32>
    %cst_32 = arith.constant 8.000000e+00 : f32
    %66 = vector.broadcast %cst_32 : f32 to vector<1x64xf32>
    %67 = arith.divf %65, %66 : vector<1x64xf32>
    %68 = arith.mulf %63, %63 : vector<8x64xf32>
    %cst_33 = arith.constant dense<0.000000e+00> : vector<64xf32>
    %69 = vector.multi_reduction <add>, %68, %cst_33 [0] : vector<8x64xf32> to vector<64xf32>
    %70 = vector.shape_cast %69 : vector<64xf32> to vector<1x64xf32>
    %cst_34 = arith.constant 8.000000e+00 : f32
    %71 = vector.broadcast %cst_34 : f32 to vector<1x64xf32>
    %72 = arith.divf %70, %71 : vector<1x64xf32>
    %73 = arith.mulf %67, %67 : vector<1x64xf32>
    %74 = arith.subf %72, %73 : vector<1x64xf32>
    %cst_35 = arith.constant 0.000000e+00 : f32
    %75 = vector.broadcast %cst_35 : f32 to vector<1x64xf32>
    %76 = arith.maximumf %74, %75 : vector<1x64xf32>
    %c0_36 = arith.constant 0 : index
    %c0_37 = arith.constant 0 : index
    %77 = vector.load %arg8[%c0_36, %c0_37] : memref<1x64xf32, #tpu.memory_space<vmem>>, vector<1x64xf32>
    %cst_38 = arith.constant 9.99999974E-6 : f32
    %78 = vector.broadcast %cst_38 : f32 to vector<1x64xf32>
    %79 = arith.addf %76, %78 : vector<1x64xf32>
    %80 = math.rsqrt %79 : vector<1x64xf32>
    %81 = arith.mulf %77, %80 : vector<1x64xf32>
    %82 = vector.broadcast %67 : vector<1x64xf32> to vector<8x64xf32>
    %83 = arith.subf %63, %82 : vector<8x64xf32>
    %84 = vector.broadcast %81 : vector<1x64xf32> to vector<8x64xf32>
    %85 = arith.mulf %83, %84 : vector<8x64xf32>
    %c0_39 = arith.constant 0 : index
    %c0_40 = arith.constant 0 : index
    %86 = vector.load %arg9[%c0_39, %c0_40] : memref<1x64xf32, #tpu.memory_space<vmem>>, vector<1x64xf32>
    %87 = vector.broadcast %86 : vector<1x64xf32> to vector<8x64xf32>
    %88 = arith.addf %85, %87 : vector<8x64xf32>
    %cst_41 = arith.constant 0.000000e+00 : f32
    %89 = vector.broadcast %cst_41 : f32 to vector<8x64xf32>
    %90 = arith.maximumf %88, %89 : vector<8x64xf32>
    %c0_42 = arith.constant 0 : index
    %c0_43 = arith.constant 0 : index
    %91 = vector.load %arg10[%c0_42, %c0_43] : memref<1x64xf32, #tpu.memory_space<vmem>>, vector<1x64xf32>
    %92 = vector.broadcast %91 : vector<1x64xf32> to vector<8x64xf32>
    %93 = arith.mulf %90, %92 : vector<8x64xf32>
    %cst_44 = arith.constant dense<0.000000e+00> : vector<8xf32>
    %94 = vector.multi_reduction <add>, %93, %cst_44 [1] : vector<8x64xf32> to vector<8xf32>
    %95 = vector.shape_cast %94 : vector<8xf32> to vector<8x1xf32>
    %c0_45 = arith.constant 0 : index
    %c0_46 = arith.constant 0 : index
    %96 = vector.load %arg11[%c0_45, %c0_46] : memref<1x1xf32, #tpu.memory_space<vmem>>, vector<1x1xf32>
    %97 = vector.broadcast %96 : vector<1x1xf32> to vector<8x1xf32>
    %98 = arith.addf %95, %97 : vector<8x1xf32>
    %99 = math.tanh %98 : vector<8x1xf32>
    %c0_47 = arith.constant 0 : index
    %c0_48 = arith.constant 0 : index
    %100 = vector.load %arg12[%c0_47, %c0_48] : memref<8x1xf32, #tpu.memory_space<vmem>>, vector<8x1xf32>
    tpu.vector_store %arg12[%c0_47, %c0_48], %99 {strides = array<i32>} : memref<8x1xf32, #tpu.memory_space<vmem>>, vector<8x1xf32>,
    return
  }
}

</mosaic_0001>

<llo_original>
// kernel: reward_forward.1
$region0: #{reward_forward.1}
  #allocation0 [shape = 'u32[]', space=smem, size = 0x4, offset = 0x4, fixed_abs, tag = 'smem constant byte address 0x4 - core index']
  #allocation1 [shape = 'u32[144,128]{1,0:T(1,128)}', space=vmem, size = 0x12000, scoped, tag = 'internal scratch']
  #allocation2 [shape = 'f32[1,1]{1,0:T(1,128)S(1)}', space=vmem, size = 0x200, scoped, tag = 'scoped memory for reward_forward.1']
  %s0 = inlined_call_operand.vmem [shape: f32[8,32], index: 0, kind: input, shape index: {}]
  %s1 = inlined_call_operand.vmem [shape: bf16[32,512], index: 1, kind: input, shape index: {}]
  %s2 = inlined_call_operand.vmem [shape: f32[1,512], index: 2, kind: input, shape index: {}]
  %s3 = inlined_call_operand.vmem [shape: f32[1,512], index: 3, kind: input, shape index: {}]
  %s4 = inlined_call_operand.hbm [shape: bf16[512,256], index: 4, kind: input, shape index: {}]
  %s5 = inlined_call_operand.vmem [shape: f32[1,256], index: 5, kind: input, shape index: {}]
  %s6 = inlined_call_operand.vmem [shape: f32[1,256], index: 6, kind: input, shape index: {}]
  %s7 = inlined_call_operand.vmem [shape: bf16[256,64], index: 7, kind: input, shape index: {}]
  %s8 = inlined_call_operand.vmem [shape: f32[1,64], index: 8, kind: input, shape index: {}]
  %s9 = inlined_call_operand.vmem [shape: f32[1,64], index: 9, kind: input, shape index: {}]
  %s10 = inlined_call_operand.vmem [shape: f32[1,64], index: 10, kind: input, shape index: {}]
  %s11 = inlined_call_operand.<no memory space> [shape: f32[1,1], index: 11, kind: input, shape index: {}]
  %s12 = inlined_call_operand.vmem [shape: f32[8,1], index: 12, kind: output, shape index: {}]
  %s13 = sld [smem:[#allocation0]]
  $region62: #{reward_forward.1} parent=0
    _
  %s15 = ssub.s32 1, %s13
  %s16 = scalar_select 0, %s15, %s13
  %v17 = vstv %s11
  %18 = vst [vmem:[#allocation2] sm:$0x1] %v17
  $region1: #{reward_forward.1} parent=0
    #allocation3 [shape = 'u8[262144]{0}', space=vmem, size = 0x40000, scoped, tag = 'input window, operand 4, single buffered']
    #allocation4 [shape = 's32[1]{0}', space=sflag, size = 0x4, scoped, tag = 'scoped memory for reward_forward.1']
    %19 = vsyncpa [#allocation4], 0
    // Predicated region
    $region2: #{reward_forward.1} parent=1 // pred_check
      _
    $region3: #{reward_forward.1} parent=1 // pred_check_branch
      %21 = sbr.rel (0) target = $region5
    $region4: #{reward_forward.1} parent=1 // pred_region
      _
    $region5: #{reward_forward.1} parent=1 // pred_fallthru
      _
    // Predicated region
    $region6: #{reward_forward.1} parent=1 // pred_check
      _
    $region7: #{reward_forward.1} parent=1 // pred_check_branch
      %23 = sbr.rel (0) target = $region9
    $region8: #{reward_forward.1} parent=1 // pred_region
      _
    $region9: #{reward_forward.1} parent=1 // pred_fallthru
      _
    // Predicated region
    $region10: #{reward_forward.1} parent=1 // pred_check
      _
    $region11: #{reward_forward.1} parent=1 // pred_check_branch
      %25 = sbr.rel (0) target = $region13
    $region12: #{reward_forward.1} parent=1 // pred_region
      _
    $region13: #{reward_forward.1} parent=1 // pred_fallthru
      _
    // Predicated region
    $region14: #{reward_forward.1} parent=1 // pred_check
      _
    $region15: #{reward_forward.1} parent=1 // pred_check_branch
      %27 = sbr.rel (0) target = $region17
    $region16: #{reward_forward.1} parent=1 // pred_region
      _
    $region17: #{reward_forward.1} parent=1 // pred_fallthru
      _
    // Predicated region
    $region18: #{reward_forward.1} parent=1 // pred_check
      _
    $region19: #{reward_forward.1} parent=1 // pred_check_branch
      %29 = sbr.rel (0) target = $region21
    $region20: #{reward_forward.1} parent=1 // pred_region
      %s31 = ssub.s32 8192, 8192
      %32 = vsyncadd [#allocation4], %s31
      %s33 = sshll.u32 [#allocation3], 4
      %s34 = int_to_ptr.vmem [resolvable:$true] %s33
      %39 = dma.hbm_to_vmem [thread:$0]  %s4, 8192, %s34, [#allocation4], 128, 128, 8
    $region21: #{reward_forward.1} parent=1 // pred_fallthru
      _
    // Predicated region
    $region22: #{reward_forward.1} parent=1 // pred_check
      _
    $region23: #{reward_forward.1} parent=1 // pred_check_branch
      %41 = sbr.rel (0) target = $region25
    $region24: #{reward_forward.1} parent=1 // pred_region
      _
    $region25: #{reward_forward.1} parent=1 // pred_fallthru
      _
    // Predicated region
    $region26: #{reward_forward.1} parent=1 // pred_check
      _
    $region27: #{reward_forward.1} parent=1 // pred_check_branch
      %43 = sbr.rel (0) target = $region29
    $region28: #{reward_forward.1} parent=1 // pred_region
      _
    $region29: #{reward_forward.1} parent=1 // pred_fallthru
      _
    // Predicated region
    $region30: #{reward_forward.1} parent=1 // pred_check
      _
    $region31: #{reward_forward.1} parent=1 // pred_check_branch
      %45 = sbr.rel (0) target = $region33
    $region32: #{reward_forward.1} parent=1 // pred_region
      _
    $region33: #{reward_forward.1} parent=1 // pred_fallthru
      _
    // Predicated region
    $region34: #{reward_forward.1} parent=1 // pred_check
      _
    $region35: #{reward_forward.1} parent=1 // pred_check_branch
      %47 = sbr.rel (0) target = $region37
    $region36: #{reward_forward.1} parent=1 // pred_region
      _
    $region37: #{reward_forward.1} parent=1 // pred_fallthru
      _
    // Predicated region
    $region38: #{reward_forward.1} parent=1 // pred_check
      _
    $region39: #{reward_forward.1} parent=1 // pred_check_branch
      %49 = sbr.rel (0) target = $region41
    $region40: #{reward_forward.1} parent=1 // pred_region
      _
    $region41: #{reward_forward.1} parent=1 // pred_fallthru
      _
    // Predicated region
    $region42: #{reward_forward.1} parent=1 // pred_check
      _
    $region43: #{reward_forward.1} parent=1 // pred_check_branch
      %51 = sbr.rel (0) target = $region45
    $region44: #{reward_forward.1} parent=1 // pred_region
      _
    $region45: #{reward_forward.1} parent=1 // pred_fallthru
      _
    // Predicated region
    $region46: #{reward_forward.1} parent=1 // pred_check
      _
    $region47: #{reward_forward.1} parent=1 // pred_check_branch
      %53 = sbr.rel (0) target = $region49
    $region48: #{reward_forward.1} parent=1 // pred_region
      _
    $region49: #{reward_forward.1} parent=1 // pred_fallthru
      _
    // Predicated region
    $region50: #{reward_forward.1} parent=1 // pred_check
      _
    $region51: #{reward_forward.1} parent=1 // pred_check_branch
      %55 = sbr.rel (0) target = $region53
    $region52: #{reward_forward.1} parent=1 // pred_region
      %56 = dma.done [#allocation4], 8192
    $region53: #{reward_forward.1} parent=1 // pred_fallthru
      _
    %v57 = vld [vmem:[%s0] sm:$0xff]
    %v58 = vld [vmem:[%s1] sm:$0xff]
    %v59 = vld [vmem:[%s1 + $0x8] sm:$0xff]
    %v60 = vld [vmem:[%s1 + $0x10] sm:$0xff]
    %v61 = vld [vmem:[%s1 + $0x18] sm:$0xff]
    %v62 = vld [vmem:[%s1 + $0x20] sm:$0xff]
    %v63 = vld [vmem:[%s1 + $0x28] sm:$0xff]
    %v64 = vld [vmem:[%s1 + $0x30] sm:$0xff]
    %v65 = vld [vmem:[%s1 + $0x38] sm:$0xff]
    %v66 = vunpack.c.l.bf16 %v58
    %v67 = vunpack.c.h.bf16 %v58
    %v68 = vunpack.c.l.bf16 %v59
    %v69 = vunpack.c.h.bf16 %v59
    %v70 = vunpack.c.l.bf16 %v60
    %v71 = vunpack.c.h.bf16 %v60
    %v72 = vunpack.c.l.bf16 %v61
    %v73 = vunpack.c.h.bf16 %v61
    %v74 = vunpack.c.l.bf16 %v62
    %v75 = vunpack.c.h.bf16 %v62
    %v76 = vunpack.c.l.bf16 %v63
    %v77 = vunpack.c.h.bf16 %v63
    %v78 = vunpack.c.l.bf16 %v64
    %v79 = vunpack.c.h.bf16 %v64
    %v80 = vunpack.c.l.bf16 %v65
    %v81 = vunpack.c.h.bf16 %v65
    %vm82 = vcmask 261120
    %v84 = vsel %vm82, %v57, 0
    %86 = vmatprep.subr.mxu0 %v67
    %87 = vmatpush1.msra.mxu0 %v66
    %88 = vmatprep.subr.mxu0 %v71
    %89 = vmatpush1.msra.mxu0 %v70
    %90 = vmatprep.subr.mxu0 %v75
    %91 = vmatpush1.msra.mxu0 %v74
    %92 = vmatprep.subr.mxu0 %v79
    %93 = vmatpush1.msra.mxu0 %v78
    %94 = vmatprep.subr.mxu0 0.0
    %95 = vmatpush1.msra.mxu0 0.0
    %96 = vmatprep.subr.mxu0 0.0
    %97 = vmatpush1.msra.mxu0 0.0
    %98 = vmatprep.subr.mxu0 0.0
    %99 = vmatpush1.msra.mxu0 0.0
    %100 = vmatprep.subr.mxu0 0.0
    %101 = vmatpush1.msra.mxu0 0.0
    %102 = vmatprep.subr.mxu0 0.0
    %103 = vmatpush1.msra.mxu0 0.0
    %104 = vmatprep.subr.mxu0 0.0
    %105 = vmatpush1.msra.mxu0 0.0
    %106 = vmatprep.subr.mxu0 0.0
    %107 = vmatpush1.msra.mxu0 0.0
    %108 = vmatprep.subr.mxu0 0.0
    %109 = vmatpush1.msra.mxu0 0.0
    %110 = vmatprep.subr.mxu0 0.0
    %111 = vmatpush1.msra.mxu0 0.0
    %112 = vmatprep.subr.mxu0 0.0
    %113 = vmatpush1.msra.mxu0 0.0
    %114 = vmatprep.subr.mxu0 0.0
    %115 = vmatpush1.msra.mxu0 0.0
    %116 = vmatprep.subr.mxu0 0.0
    %117 = vmatpush1.msra.mxu0 0.0
    %118 = vmatprep.subr.mxu0 0.0
    %119 = vmatpush1.msra.mxu0 0.0
    %120 = vmatprep.subr.mxu0 0.0
    %121 = vmatpush1.msra.mxu0 0.0
    %122 = vmatprep.subr.mxu0 0.0
    %123 = vmatpush1.msra.mxu0 0.0
    %124 = vmatprep.subr.mxu0 0.0
    %125 = vmatpush1.msra.mxu0 0.0
    %126 = vmatprep.subr.mxu0 0.0
    %127 = vmatpush1.msra.mxu0 0.0
    %128 = vmatprep.subr.mxu0 0.0
    %129 = vmatpush1.msra.mxu0 0.0
    %130 = vmatprep.subr.mxu0 0.0
    %131 = vmatpush1.msra.mxu0 0.0
    %132 = vmatprep.subr.mxu0 0.0
    %133 = vmatpush1.msra.mxu0 0.0
    %134 = vmatprep.subr.mxu0 0.0
    %135 = vmatpush1.msra.mxu0 0.0
    %136 = vmatprep.subr.mxu0 0.0
    %137 = vmatpush1.msra.mxu0 0.0
    %138 = vmatprep.subr.mxu0 0.0
    %139 = vmatpush1.msra.mxu0 0.0
    %140 = vmatprep.subr.mxu0 0.0
    %141 = vmatpush1.msra.mxu0 0.0
    %142 = vmatprep.subr.mxu0 0.0
    %143 = vmatpush1.msra.mxu0 0.0
    %144 = vmatprep.subr.mxu0 0.0
    %145 = vmatpush1.msra.mxu0 0.0
    %146 = vmatprep.subr.mxu0 0.0
    %147 = vmatpush1.msra.mxu0 0.0
    %148 = vmatprep.subr.mxu0 0.0
    %149 = vmatpush1.msra.mxu0 0.0
    %150 = vmatprep.mubr.f32.mxu0 0.0
    %151 = vmatmul.mubr.f32.gmra.mrb[0].mxu0 %v84
    %v152 = vpop.f32.mrb[0].mxu0
    %v153 = vadd.f32 0.0, %v152
    %v154 = vpop.f32.mrb[0].mxu0
    %v155 = vadd.f32 0.0, %v154
    %156 = vdwg.mxu0
    %157 = vmatprep.subr.mxu0 %v69
    %158 = vmatpush1.msra.mxu0 %v68
    %159 = vmatprep.subr.mxu0 %v73
    %160 = vmatpush1.msra.mxu0 %v72
    %161 = vmatprep.subr.mxu0 %v77
    %162 = vmatpush1.msra.mxu0 %v76
    %163 = vmatprep.subr.mxu0 %v81
    %164 = vmatpush1.msra.mxu0 %v80
    %165 = vmatprep.subr.mxu0 0.0
    %166 = vmatpush1.msra.mxu0 0.0
    %167 = vmatprep.subr.mxu0 0.0
    %168 = vmatpush1.msra.mxu0 0.0
    %169 = vmatprep.subr.mxu0 0.0
    %170 = vmatpush1.msra.mxu0 0.0
    %171 = vmatprep.subr.mxu0 0.0
    %172 = vmatpush1.msra.mxu0 0.0
    %173 = vmatprep.subr.mxu0 0.0
    %174 = vmatpush1.msra.mxu0 0.0
    %175 = vmatprep.subr.mxu0 0.0
    %176 = vmatpush1.msra.mxu0 0.0
    %177 = vmatprep.subr.mxu0 0.0
    %178 = vmatpush1.msra.mxu0 0.0
    %179 = vmatprep.subr.mxu0 0.0
    %180 = vmatpush1.msra.mxu0 0.0
    %181 = vmatprep.subr.mxu0 0.0
    %182 = vmatpush1.msra.mxu0 0.0
    %183 = vmatprep.subr.mxu0 0.0
    %184 = vmatpush1.msra.mxu0 0.0
    %185 = vmatprep.subr.mxu0 0.0
    %186 = vmatpush1.msra.mxu0 0.0
    %187 = vmatprep.subr.mxu0 0.0
    %188 = vmatpush1.msra.mxu0 0.0
    %189 = vmatprep.subr.mxu0 0.0
    %190 = vmatpush1.msra.mxu0 0.0
    %191 = vmatprep.subr.mxu0 0.0
    %192 = vmatpush1.msra.mxu0 0.0
    %193 = vmatprep.subr.mxu0 0.0
    %194 = vmatpush1.msra.mxu0 0.0
    %195 = vmatprep.subr.mxu0 0.0
    %196 = vmatpush1.msra.mxu0 0.0
    %197 = vmatprep.subr.mxu0 0.0
    %198 = vmatpush1.msra.mxu0 0.0
    %199 = vmatprep.subr.mxu0 0.0
    %200 = vmatpush1.msra.mxu0 0.0
    %201 = vmatprep.subr.mxu0 0.0
    %202 = vmatpush1.msra.mxu0 0.0
    %203 = vmatprep.subr.mxu0 0.0
    %204 = vmatpush1.msra.mxu0 0.0
    %205 = vmatprep.subr.mxu0 0.0
    %206 = vmatpush1.msra.mxu0 0.0
    %207 = vmatprep.subr.mxu0 0.0
    %208 = vmatpush1.msra.mxu0 0.0
    %209 = vmatprep.subr.mxu0 0.0
    %210 = vmatpush1.msra.mxu0 0.0
    %211 = vmatprep.subr.mxu0 0.0
    %212 = vmatpush1.msra.mxu0 0.0
    %213 = vmatprep.subr.mxu0 0.0
    %214 = vmatpush1.msra.mxu0 0.0
    %215 = vmatprep.subr.mxu0 0.0
    %216 = vmatpush1.msra.mxu0 0.0
    %217 = vmatprep.subr.mxu0 0.0
    %218 = vmatpush1.msra.mxu0 0.0
    %219 = vmatprep.subr.mxu0 0.0
    %220 = vmatpush1.msra.mxu0 0.0
    %221 = vmatprep.mubr.f32.mxu0 0.0
    %222 = vmatmul.mubr.f32.gmra.mrb[0].mxu0 %v84
    %v223 = vpop.f32.mrb[0].mxu0
    %v224 = vadd.f32 0.0, %v223
    %v225 = vpop.f32.mrb[0].mxu0
    %v226 = vadd.f32 0.0, %v225
    %227 = vdwg.mxu0
    %v228 = vrot.slane %v153, 4
    %v229 = vadd.f32 %v153, %v228
    %v230 = vrot.slane %v229, 2
    %v231 = vadd.f32 %v229, %v230
    %v232 = vrot.slane %v231, 1
    %v233 = vadd.f32 %v231, %v232
    %v234 = vrot.slane %v155, 4
    %v235 = vadd.f32 %v155, %v234
    %v236 = vrot.slane %v235, 2
    %v237 = vadd.f32 %v235, %v236
    %v238 = vrot.slane %v237, 1
    %v239 = vadd.f32 %v237, %v238
    %v240 = vrot.slane %v224, 4
    %v241 = vadd.f32 %v224, %v240
    %v242 = vrot.slane %v241, 2
    %v243 = vadd.f32 %v241, %v242
    %v244 = vrot.slane %v243, 1
    %v245 = vadd.f32 %v243, %v244
    %v246 = vrot.slane %v226, 4
    %v247 = vadd.f32 %v226, %v246
    %v248 = vrot.slane %v247, 2
    %v249 = vadd.f32 %v247, %v248
    %v250 = vrot.slane %v249, 1
    %v251 = vadd.f32 %v249, %v250
    %v252 = vrcp.pop 8.0
    %v253 = vmul.f32 %v233, %v252
    %v254 = vmul.f32 %v239, %v252
    %v255 = vmul.f32 %v245, %v252
    %v256 = vmul.f32 %v251, %v252
    %v257 = vmul.f32 %v153, %v153
    %v258 = vmul.f32 %v155, %v155
    %v259 = vmul.f32 %v224, %v224
    %v260 = vmul.f32 %v226, %v226
    %v261 = vrot.slane %v257, 4
    %v262 = vadd.f32 %v257, %v261
    %v263 = vrot.slane %v262, 2
    %v264 = vadd.f32 %v262, %v263
    %v265 = vrot.slane %v264, 1
    %v266 = vadd.f32 %v264, %v265
    %v267 = vrot.slane %v258, 4
    %v268 = vadd.f32 %v258, %v267
    %v269 = vrot.slane %v268, 2
    %v270 = vadd.f32 %v268, %v269
    %v271 = vrot.slane %v270, 1
    %v272 = vadd.f32 %v270, %v271
    %v273 = vrot.slane %v259, 4
    %v274 = vadd.f32 %v259, %v273
    %v275 = vrot.slane %v274, 2
    %v276 = vadd.f32 %v274, %v275
    %v277 = vrot.slane %v276, 1
    %v278 = vadd.f32 %v276, %v277
    %v279 = vrot.slane %v260, 4
    %v280 = vadd.f32 %v260, %v279
    %v281 = vrot.slane %v280, 2
    %v282 = vadd.f32 %v280, %v281
    %v283 = vrot.slane %v282, 1
    %v284 = vadd.f32 %v282, %v283
    %v285 = vmul.f32 %v266, %v252
    %v286 = vmul.f32 %v272, %v252
    %v287 = vmul.f32 %v278, %v252
    %v288 = vmul.f32 %v284, %v252
    %v289 = vmul.f32 %v253, %v253
    %v290 = vmul.f32 %v254, %v254
    %v291 = vmul.f32 %v255, %v255
    %v292 = vmul.f32 %v256, %v256
    %v293 = vsub.f32 %v285, %v289
    %v294 = vsub.f32 %v286, %v290
    %v295 = vsub.f32 %v287, %v291
    %v296 = vsub.f32 %v288, %v292
    %v297 = vmax.f32 %v293, 0.0
    %v298 = vmax.f32 %v294, 0.0
    %v299 = vmax.f32 %v295, 0.0
    %v300 = vmax.f32 %v296, 0.0
    %v301 = vld [vmem:[%s2] sm:$0xf]
    %v302 = vadd.f32 %v297, 1e-05
    %v303 = vadd.f32 %v298, 1e-05
    %v304 = vadd.f32 %v299, 1e-05
    %v305 = vadd.f32 %v300, 1e-05
    %v306 = vrsqrt.pop %v302
    %v307 = vrsqrt.pop %v303
    %v308 = vrsqrt.pop %v304
    %v309 = vrsqrt.pop %v305
    %v314 = vcombine.low %v306, %v307
    %v315 = vcombine.low %v308, %v309
    %v317 = vunpack.c.l.s4 1966171168
    %v318 = vunpack.c.0.s8 %v317
    %v319 = vlaneseq
    %v320 = vshrl.u32 %v319, 7
    %v321 = vsub.s32 %v318, %v320
    %v322 = vrot.slane %v314, %v321
    %v324 = vunpack.c.l.s4 1966171168
    %v325 = vunpack.c.0.s8 %v324
    %v326 = vlaneseq
    %v327 = vshrl.u32 %v326, 7
    %v328 = vsub.s32 %v325, %v327
    %v329 = vrot.slane %v315, %v328
    %v330 = vcombine.low %v322, %v329
    %v332 = vunpack.c.l.s4 1966171168
    %v333 = vunpack.c.0.s8 %v332
    %v334 = vlaneseq
    %v335 = vshrl.u32 %v334, 7
    %v336 = vsub.s32 %v333, %v335
    %v337 = vrot.slane %v330, %v336
    %v339 = vmul.f32 %v301, %v337
    %v340 = vsub.f32 %v153, %v253
    %v341 = vsub.f32 %v155, %v254
    %v342 = vsub.f32 %v224, %v255
    %v343 = vsub.f32 %v226, %v256
    %v345 = vlaneseq
    %v346 = vshrl.u32 %v345, 7
    %v347 = vsub.s32 0, %v346
    %v348 = vrot.slane %v339, %v347
    %v349 = vlaneseq
    %v350 = vshrl.u32 %v349, 7
    %v351 = vsub.s32 1, %v350
    %v352 = vrot.slane %v339, %v351
    %v353 = vlaneseq
    %v354 = vshrl.u32 %v353, 7
    %v355 = vsub.s32 2, %v354
    %v356 = vrot.slane %v339, %v355
    %v357 = vlaneseq
    %v358 = vshrl.u32 %v357, 7
    %v359 = vsub.s32 3, %v358
    %v360 = vrot.slane %v339, %v359
    %v365 = vmul.f32 %v340, %v348
    %v366 = vmul.f32 %v341, %v352
    %v367 = vmul.f32 %v342, %v356
    %v368 = vmul.f32 %v343, %v360
    %v369 = vld [vmem:[%s3] sm:$0xf]
    %v371 = vlaneseq
    %v372 = vshrl.u32 %v371, 7
    %v373 = vsub.s32 0, %v372
    %v374 = vrot.slane %v369, %v373
    %v375 = vlaneseq
    %v376 = vshrl.u32 %v375, 7
    %v377 = vsub.s32 1, %v376
    %v378 = vrot.slane %v369, %v377
    %v379 = vlaneseq
    %v380 = vshrl.u32 %v379, 7
    %v381 = vsub.s32 2, %v380
    %v382 = vrot.slane %v369, %v381
    %v383 = vlaneseq
    %v384 = vshrl.u32 %v383, 7
    %v385 = vsub.s32 3, %v384
    %v386 = vrot.slane %v369, %v385
    %v391 = vadd.f32 %v365, %v374
    %v392 = vadd.f32 %v366, %v378
    %v393 = vadd.f32 %v367, %v382
    %v394 = vadd.f32 %v368, %v386
    %v395 = vmax.f32 %v391, 0.0
    %v396 = vmax.f32 %v392, 0.0
    %v397 = vmax.f32 %v393, 0.0
    %v398 = vmax.f32 %v394, 0.0
    %v399 = vld [vmem:[#allocation3] sm:$0xff]
    %v400 = vld [vmem:[#allocation3 + $0x8] sm:$0xff]
    %v401 = vld [vmem:[#allocation3 + $0x10] sm:$0xff]
    %v402 = vld [vmem:[#allocation3 + $0x18] sm:$0xff]
    %v403 = vld [vmem:[#allocation3 + $0x20] sm:$0xff]
    %v404 = vld [vmem:[#allocation3 + $0x28] sm:$0xff]
    %v405 = vld [vmem:[#allocation3 + $0x30] sm:$0xff]
    %v406 = vld [vmem:[#allocation3 + $0x38] sm:$0xff]
    %v407 = vld [vmem:[#allocation3 + $0x40] sm:$0xff]
    %v408 = vld [vmem:[#allocation3 + $0x48] sm:$0xff]
    %v409 = vld [vmem:[#allocation3 + $0x50] sm:$0xff]
    %v410 = vld [vmem:[#allocation3 + $0x58] sm:$0xff]
    %v411 = vld [vmem:[#allocation3 + $0x60] sm:$0xff]
    %v412 = vld [vmem:[#allocation3 + $0x68] sm:$0xff]
    %v413 = vld [vmem:[#allocation3 + $0x70] sm:$0xff]
    %v414 = vld [vmem:[#allocation3 + $0x78] sm:$0xff]
    %v415 = vld [vmem:[#allocation3 + $0x80] sm:$0xff]
    %v416 = vld [vmem:[#allocation3 + $0x88] sm:$0xff]
    %v417 = vld [vmem:[#allocation3 + $0x90] sm:$0xff]
    %v418 = vld [vmem:[#allocation3 + $0x98] sm:$0xff]
    %v419 = vld [vmem:[#allocation3 + $0xa0] sm:$0xff]
    %v420 = vld [vmem:[#allocation3 + $0xa8] sm:$0xff]
    %v421 = vld [vmem:[#allocation3 + $0xb0] sm:$0xff]
    %v422 = vld [vmem:[#allocation3 + $0xb8] sm:$0xff]
    %v423 = vld [vmem:[#allocation3 + $0xc0] sm:$0xff]
    %v424 = vld [vmem:[#allocation3 + $0xc8] sm:$0xff]
    %v425 = vld [vmem:[#allocation3 + $0xd0] sm:$0xff]
    %v426 = vld [vmem:[#allocation3 + $0xd8] sm:$0xff]
    %v427 = vld [vmem:[#allocation3 + $0xe0] sm:$0xff]
    %v428 = vld [vmem:[#allocation3 + $0xe8] sm:$0xff]
    %v429 = vld [vmem:[#allocation3 + $0xf0] sm:$0xff]
    %v430 = vld [vmem:[#allocation3 + $0xf8] sm:$0xff]
    %v431 = vld [vmem:[#allocation3 + $0x100] sm:$0xff]
    %v432 = vld [vmem:[#allocation3 + $0x108] sm:$0xff]
    %v433 = vld [vmem:[#allocation3 + $0x110] sm:$0xff]
    %v434 = vld [vmem:[#allocation3 + $0x118] sm:$0xff]
    %v435 = vld [vmem:[#allocation3 + $0x120] sm:$0xff]
    %v436 = vld [vmem:[#allocation3 + $0x128] sm:$0xff]
    %v437 = vld [vmem:[#allocation3 + $0x130] sm:$0xff]
    %v438 = vld [vmem:[#allocation3 + $0x138] sm:$0xff]
    %v439 = vld [vmem:[#allocation3 + $0x140] sm:$0xff]
    %v440 = vld [vmem:[#allocation3 + $0x148] sm:$0xff]
    %v441 = vld [vmem:[#allocation3 + $0x150] sm:$0xff]
    %v442 = vld [vmem:[#allocation3 + $0x158] sm:$0xff]
    %v443 = vld [vmem:[#allocation3 + $0x160] sm:$0xff]
    %v444 = vld [vmem:[#allocation3 + $0x168] sm:$0xff]
    %v445 = vld [vmem:[#allocation3 + $0x170] sm:$0xff]
    %v446 = vld [vmem:[#allocation3 + $0x178] sm:$0xff]
    %v447 = vld [vmem:[#allocation3 + $0x180] sm:$0xff]
    %v448 = vld [vmem:[#allocation3 + $0x188] sm:$0xff]
    %v449 = vld [vmem:[#allocation3 + $0x190] sm:$0xff]
    %v450 = vld [vmem:[#allocation3 + $0x198] sm:$0xff]
    %v451 = vld [vmem:[#allocation3 + $0x1a0] sm:$0xff]
    %v452 = vld [vmem:[#allocation3 + $0x1a8] sm:$0xff]
    %v453 = vld [vmem:[#allocation3 + $0x1b0] sm:$0xff]
    %v454 = vld [vmem:[#allocation3 + $0x1b8] sm:$0xff]
    %v455 = vld [vmem:[#allocation3 + $0x1c0] sm:$0xff]
    %v456 = vld [vmem:[#allocation3 + $0x1c8] sm:$0xff]
    %v457 = vld [vmem:[#allocation3 + $0x1d0] sm:$0xff]
    %v458 = vld [vmem:[#allocation3 + $0x1d8] sm:$0xff]
    %v459 = vld [vmem:[#allocation3 + $0x1e0] sm:$0xff]
    %v460 = vld [vmem:[#allocation3 + $0x1e8] sm:$0xff]
    %v461 = vld [vmem:[#allocation3 + $0x1f0] sm:$0xff]
    %v462 = vld [vmem:[#allocation3 + $0x1f8] sm:$0xff]
    %v463 = vunpack.c.l.bf16 %v399
    %v464 = vunpack.c.h.bf16 %v399
    %v465 = vunpack.c.l.bf16 %v400
    %v466 = vunpack.c.h.bf16 %v400
    %v467 = vunpack.c.l.bf16 %v401
    %v468 = vunpack.c.h.bf16 %v401
    %v469 = vunpack.c.l.bf16 %v402
    %v470 = vunpack.c.h.bf16 %v402
    %v471 = vunpack.c.l.bf16 %v403
    %v472 = vunpack.c.h.bf16 %v403
    %v473 = vunpack.c.l.bf16 %v404
    %v474 = vunpack.c.h.bf16 %v404
    %v475 = vunpack.c.l.bf16 %v405
    %v476 = vunpack.c.h.bf16 %v405
    %v477 = vunpack.c.l.bf16 %v406
    %v478 = vunpack.c.h.bf16 %v406
    %v479 = vunpack.c.l.bf16 %v407
    %v480 = vunpack.c.h.bf16 %v407
    %v481 = vunpack.c.l.bf16 %v408
    %v482 = vunpack.c.h.bf16 %v408
    %v483 = vunpack.c.l.bf16 %v409
    %v484 = vunpack.c.h.bf16 %v409
    %v485 = vunpack.c.l.bf16 %v410
    %v486 = vunpack.c.h.bf16 %v410
    %v487 = vunpack.c.l.bf16 %v411
    %v488 = vunpack.c.h.bf16 %v411
    %v489 = vunpack.c.l.bf16 %v412
    %v490 = vunpack.c.h.bf16 %v412
    %v491 = vunpack.c.l.bf16 %v413
    %v492 = vunpack.c.h.bf16 %v413
    %v493 = vunpack.c.l.bf16 %v414
    %v494 = vunpack.c.h.bf16 %v414
    %v495 = vunpack.c.l.bf16 %v415
    %v496 = vunpack.c.h.bf16 %v415
    %v497 = vunpack.c.l.bf16 %v416
    %v498 = vunpack.c.h.bf16 %v416
    %v499 = vunpack.c.l.bf16 %v417
    %v500 = vunpack.c.h.bf16 %v417
    %v501 = vunpack.c.l.bf16 %v418
    %v502 = vunpack.c.h.bf16 %v418
    %v503 = vunpack.c.l.bf16 %v419
    %v504 = vunpack.c.h.bf16 %v419
    %v505 = vunpack.c.l.bf16 %v420
    %v506 = vunpack.c.h.bf16 %v420
    %v507 = vunpack.c.l.bf16 %v421
    %v508 = vunpack.c.h.bf16 %v421
    %v509 = vunpack.c.l.bf16 %v422
    %v510 = vunpack.c.h.bf16 %v422
    %v511 = vunpack.c.l.bf16 %v423
    %v512 = vunpack.c.h.bf16 %v423
    %v513 = vunpack.c.l.bf16 %v424
    %v514 = vunpack.c.h.bf16 %v424
    %v515 = vunpack.c.l.bf16 %v425
    %v516 = vunpack.c.h.bf16 %v425
    %v517 = vunpack.c.l.bf16 %v426
    %v518 = vunpack.c.h.bf16 %v426
    %v519 = vunpack.c.l.bf16 %v427
    %v520 = vunpack.c.h.bf16 %v427
    %v521 = vunpack.c.l.bf16 %v428
    %v522 = vunpack.c.h.bf16 %v428
    %v523 = vunpack.c.l.bf16 %v429
    %v524 = vunpack.c.h.bf16 %v429
    %v525 = vunpack.c.l.bf16 %v430
    %v526 = vunpack.c.h.bf16 %v430
    %v527 = vunpack.c.l.bf16 %v431
    %v528 = vunpack.c.h.bf16 %v431
    %v529 = vunpack.c.l.bf16 %v432
    %v530 = vunpack.c.h.bf16 %v432
    %v531 = vunpack.c.l.bf16 %v433
    %v532 = vunpack.c.h.bf16 %v433
    %v533 = vunpack.c.l.bf16 %v434
    %v534 = vunpack.c.h.bf16 %v434
    %v535 = vunpack.c.l.bf16 %v435
    %v536 = vunpack.c.h.bf16 %v435
    %v537 = vunpack.c.l.bf16 %v436
    %v538 = vunpack.c.h.bf16 %v436
    %v539 = vunpack.c.l.bf16 %v437
    %v540 = vunpack.c.h.bf16 %v437
    %v541 = vunpack.c.l.bf16 %v438
    %v542 = vunpack.c.h.bf16 %v438
    %v543 = vunpack.c.l.bf16 %v439
    %v544 = vunpack.c.h.bf16 %v439
    %v545 = vunpack.c.l.bf16 %v440
    %v546 = vunpack.c.h.bf16 %v440
    %v547 = vunpack.c.l.bf16 %v441
    %v548 = vunpack.c.h.bf16 %v441
    %v549 = vunpack.c.l.bf16 %v442
    %v550 = vunpack.c.h.bf16 %v442
    %v551 = vunpack.c.l.bf16 %v443
    %v552 = vunpack.c.h.bf16 %v443
    %v553 = vunpack.c.l.bf16 %v444
    %v554 = vunpack.c.h.bf16 %v444
    %v555 = vunpack.c.l.bf16 %v445
    %v556 = vunpack.c.h.bf16 %v445
    %v557 = vunpack.c.l.bf16 %v446
    %v558 = vunpack.c.h.bf16 %v446
    %v559 = vunpack.c.l.bf16 %v447
    %v560 = vunpack.c.h.bf16 %v447
    %v561 = vunpack.c.l.bf16 %v448
    %v562 = vunpack.c.h.bf16 %v448
    %v563 = vunpack.c.l.bf16 %v449
    %v564 = vunpack.c.h.bf16 %v449
    %v565 = vunpack.c.l.bf16 %v450
    %v566 = vunpack.c.h.bf16 %v450
    %v567 = vunpack.c.l.bf16 %v451
    %v568 = vunpack.c.h.bf16 %v451
    %v569 = vunpack.c.l.bf16 %v452
    %v570 = vunpack.c.h.bf16 %v452
    %v571 = vunpack.c.l.bf16 %v453
    %v572 = vunpack.c.h.bf16 %v453
    %v573 = vunpack.c.l.bf16 %v454
    %v574 = vunpack.c.h.bf16 %v454
    %v575 = vunpack.c.l.bf16 %v455
    %v576 = vunpack.c.h.bf16 %v455
    %v577 = vunpack.c.l.bf16 %v456
    %v578 = vunpack.c.h.bf16 %v456
    %v579 = vunpack.c.l.bf16 %v457
    %v580 = vunpack.c.h.bf16 %v457
    %v581 = vunpack.c.l.bf16 %v458
    %v582 = vunpack.c.h.bf16 %v458
    %v583 = vunpack.c.l.bf16 %v459
    %v584 = vunpack.c.h.bf16 %v459
    %v585 = vunpack.c.l.bf16 %v460
    %v586 = vunpack.c.h.bf16 %v460
    %v587 = vunpack.c.l.bf16 %v461
    %v588 = vunpack.c.h.bf16 %v461
    %v589 = vunpack.c.l.bf16 %v462
    %v590 = vunpack.c.h.bf16 %v462
    %591 = vmatprep.subr.mxu0 %v464
    %592 = vmatpush1.msra.mxu0 %v463
    %593 = vmatprep.subr.mxu0 %v466
    %594 = vmatpush1.msra.mxu0 %v465
    %595 = vmatprep.subr.mxu0 %v468
    %596 = vmatpush1.msra.mxu0 %v467
    %597 = vmatprep.subr.mxu0 %v470
    %598 = vmatpush1.msra.mxu0 %v469
    %599 = vmatprep.subr.mxu0 %v472
    %600 = vmatpush1.msra.mxu0 %v471
    %601 = vmatprep.subr.mxu0 %v474
    %602 = vmatpush1.msra.mxu0 %v473
    %603 = vmatprep.subr.mxu0 %v476
    %604 = vmatpush1.msra.mxu0 %v475
    %605 = vmatprep.subr.mxu0 %v478
    %606 = vmatpush1.msra.mxu0 %v477
    %607 = vmatprep.subr.mxu0 %v480
    %608 = vmatpush1.msra.mxu0 %v479
    %609 = vmatprep.subr.mxu0 %v482
    %610 = vmatpush1.msra.mxu0 %v481
    %611 = vmatprep.subr.mxu0 %v484
    %612 = vmatpush1.msra.mxu0 %v483
    %613 = vmatprep.subr.mxu0 %v486
    %614 = vmatpush1.msra.mxu0 %v485
    %615 = vmatprep.subr.mxu0 %v488
    %616 = vmatpush1.msra.mxu0 %v487
    %617 = vmatprep.subr.mxu0 %v490
    %618 = vmatpush1.msra.mxu0 %v489
    %619 = vmatprep.subr.mxu0 %v492
    %620 = vmatpush1.msra.mxu0 %v491
    %621 = vmatprep.subr.mxu0 %v494
    %622 = vmatpush1.msra.mxu0 %v493
    %623 = vmatprep.subr.mxu0 %v496
    %624 = vmatpush1.msra.mxu0 %v495
    %625 = vmatprep.subr.mxu0 %v498
    %626 = vmatpush1.msra.mxu0 %v497
    %627 = vmatprep.subr.mxu0 %v500
    %628 = vmatpush1.msra.mxu0 %v499
    %629 = vmatprep.subr.mxu0 %v502
    %630 = vmatpush1.msra.mxu0 %v501
    %631 = vmatprep.subr.mxu0 %v504
    %632 = vmatpush1.msra.mxu0 %v503
    %633 = vmatprep.subr.mxu0 %v506
    %634 = vmatpush1.msra.mxu0 %v505
    %635 = vmatprep.subr.mxu0 %v508
    %636 = vmatpush1.msra.mxu0 %v507
    %637 = vmatprep.subr.mxu0 %v510
    %638 = vmatpush1.msra.mxu0 %v509
    %639 = vmatprep.subr.mxu0 %v512
    %640 = vmatpush1.msra.mxu0 %v511
    %641 = vmatprep.subr.mxu0 %v514
    %642 = vmatpush1.msra.mxu0 %v513
    %643 = vmatprep.subr.mxu0 %v516
    %644 = vmatpush1.msra.mxu0 %v515
    %645 = vmatprep.subr.mxu0 %v518
    %646 = vmatpush1.msra.mxu0 %v517
    %647 = vmatprep.subr.mxu0 %v520
    %648 = vmatpush1.msra.mxu0 %v519
    %649 = vmatprep.subr.mxu0 %v522
    %650 = vmatpush1.msra.mxu0 %v521
    %651 = vmatprep.subr.mxu0 %v524
    %652 = vmatpush1.msra.mxu0 %v523
    %653 = vmatprep.subr.mxu0 %v526
    %654 = vmatpush1.msra.mxu0 %v525
    %655 = vmatprep.mubr.f32.mxu0 %v396
    %656 = vmatmul.mubr.f32.gmra.mrb[0].mxu0 %v395
    %v657 = vpop.f32.mrb[0].mxu0
    %v658 = vadd.f32 0.0, %v657
    %v659 = vpop.f32.mrb[0].mxu0
    %v660 = vadd.f32 0.0, %v659
    %661 = vdwg.mxu0
    %662 = vmatprep.subr.mxu0 %v528
    %663 = vmatpush1.msra.mxu0 %v527
    %664 = vmatprep.subr.mxu0 %v530
    %665 = vmatpush1.msra.mxu0 %v529
    %666 = vmatprep.subr.mxu0 %v532
    %667 = vmatpush1.msra.mxu0 %v531
    %668 = vmatprep.subr.mxu0 %v534
    %669 = vmatpush1.msra.mxu0 %v533
    %670 = vmatprep.subr.mxu0 %v536
    %671 = vmatpush1.msra.mxu0 %v535
    %672 = vmatprep.subr.mxu0 %v538
    %673 = vmatpush1.msra.mxu0 %v537
    %674 = vmatprep.subr.mxu0 %v540
    %675 = vmatpush1.msra.mxu0 %v539
    %676 = vmatprep.subr.mxu0 %v542
    %677 = vmatpush1.msra.mxu0 %v541
    %678 = vmatprep.subr.mxu0 %v544
    %679 = vmatpush1.msra.mxu0 %v543
    %680 = vmatprep.subr.mxu0 %v546
    %681 = vmatpush1.msra.mxu0 %v545
    %682 = vmatprep.subr.mxu0 %v548
    %683 = vmatpush1.msra.mxu0 %v547
    %684 = vmatprep.subr.mxu0 %v550
    %685 = vmatpush1.msra.mxu0 %v549
    %686 = vmatprep.subr.mxu0 %v552
    %687 = vmatpush1.msra.mxu0 %v551
    %688 = vmatprep.subr.mxu0 %v554
    %689 = vmatpush1.msra.mxu0 %v553
    %690 = vmatprep.subr.mxu0 %v556
    %691 = vmatpush1.msra.mxu0 %v555
    %692 = vmatprep.subr.mxu0 %v558
    %693 = vmatpush1.msra.mxu0 %v557
    %694 = vmatprep.subr.mxu0 %v560
    %695 = vmatpush1.msra.mxu0 %v559
    %696 = vmatprep.subr.mxu0 %v562
    %697 = vmatpush1.msra.mxu0 %v561
    %698 = vmatprep.subr.mxu0 %v564
    %699 = vmatpush1.msra.mxu0 %v563
    %700 = vmatprep.subr.mxu0 %v566
    %701 = vmatpush1.msra.mxu0 %v565
    %702 = vmatprep.subr.mxu0 %v568
    %703 = vmatpush1.msra.mxu0 %v567
    %704 = vmatprep.subr.mxu0 %v570
    %705 = vmatpush1.msra.mxu0 %v569
    %706 = vmatprep.subr.mxu0 %v572
    %707 = vmatpush1.msra.mxu0 %v571
    %708 = vmatprep.subr.mxu0 %v574
    %709 = vmatpush1.msra.mxu0 %v573
    %710 = vmatprep.subr.mxu0 %v576
    %711 = vmatpush1.msra.mxu0 %v575
    %712 = vmatprep.subr.mxu0 %v578
    %713 = vmatpush1.msra.mxu0 %v577
    %714 = vmatprep.subr.mxu0 %v580
    %715 = vmatpush1.msra.mxu0 %v579
    %716 = vmatprep.subr.mxu0 %v582
    %717 = vmatpush1.msra.mxu0 %v581
    %718 = vmatprep.subr.mxu0 %v584
    %719 = vmatpush1.msra.mxu0 %v583
    %720 = vmatprep.subr.mxu0 %v586
    %721 = vmatpush1.msra.mxu0 %v585
    %722 = vmatprep.subr.mxu0 %v588
    %723 = vmatpush1.msra.mxu0 %v587
    %724 = vmatprep.subr.mxu0 %v590
    %725 = vmatpush1.msra.mxu0 %v589
    %726 = vmatprep.mubr.f32.mxu0 %v398
    %727 = vmatmul.mubr.f32.gmra.mrb[0].mxu0 %v397
    %v728 = vpop.f32.mrb[0].mxu0
    %v729 = vadd.f32 %v658, %v728
    %v730 = vpop.f32.mrb[0].mxu0
    %v731 = vadd.f32 %v660, %v730
    %732 = vdwg.mxu0
    %v733 = vrot.slane %v729, 4
    %v734 = vadd.f32 %v729, %v733
    %v735 = vrot.slane %v734, 2
    %v736 = vadd.f32 %v734, %v735
    %v737 = vrot.slane %v736, 1
    %v738 = vadd.f32 %v736, %v737
    %v739 = vrot.slane %v731, 4
    %v740 = vadd.f32 %v731, %v739
    %v741 = vrot.slane %v740, 2
    %v742 = vadd.f32 %v740, %v741
    %v743 = vrot.slane %v742, 1
    %v744 = vadd.f32 %v742, %v743
    %v745 = vmul.f32 %v738, %v252
    %v746 = vmul.f32 %v744, %v252
    %v747 = vmul.f32 %v729, %v729
    %v748 = vmul.f32 %v731, %v731
    %v749 = vrot.slane %v747, 4
    %v750 = vadd.f32 %v747, %v749
    %v751 = vrot.slane %v750, 2
    %v752 = vadd.f32 %v750, %v751
    %v753 = vrot.slane %v752, 1
    %v754 = vadd.f32 %v752, %v753
    %v755 = vrot.slane %v748, 4
    %v756 = vadd.f32 %v748, %v755
    %v757 = vrot.slane %v756, 2
    %v758 = vadd.f32 %v756, %v757
    %v759 = vrot.slane %v758, 1
    %v760 = vadd.f32 %v758, %v759
    %v761 = vmul.f32 %v754, %v252
    %v762 = vmul.f32 %v760, %v252
    %v763 = vmul.f32 %v745, %v745
    %v764 = vmul.f32 %v746, %v746
    %v765 = vsub.f32 %v761, %v763
    %v766 = vsub.f32 %v762, %v764
    %v767 = vmax.f32 %v765, 0.0
    %v768 = vmax.f32 %v766, 0.0
    %v769 = vld [vmem:[%s5] sm:$0x3]
    %v770 = vadd.f32 %v767, 1e-05
    %v771 = vadd.f32 %v768, 1e-05
    %v772 = vrsqrt.pop %v770
    %v773 = vrsqrt.pop %v771
    %v776 = vcombine.low %v772, %v773
    %v778 = vunpack.c.l.s4 1966171168
    %v779 = vunpack.c.0.s8 %v778
    %v780 = vlaneseq
    %v781 = vshrl.u32 %v780, 7
    %v782 = vsub.s32 %v779, %v781
    %v783 = vrot.slane %v776, %v782
    %v785 = vunpack.c.l.s4 1966171168
    %v786 = vunpack.c.0.s8 %v785
    %v787 = vlaneseq
    %v788 = vshrl.u32 %v787, 7
    %v789 = vsub.s32 %v786, %v788
    %v790 = vrot.slane %v783, %v789
    %v792 = vmul.f32 %v769, %v790
    %v793 = vsub.f32 %v729, %v745
    %v794 = vsub.f32 %v731, %v746
    %v796 = vlaneseq
    %v797 = vshrl.u32 %v796, 7
    %v798 = vsub.s32 0, %v797
    %v799 = vrot.slane %v792, %v798
    %v800 = vlaneseq
    %v801 = vshrl.u32 %v800, 7
    %v802 = vsub.s32 1, %v801
    %v803 = vrot.slane %v792, %v802
    %v806 = vmul.f32 %v793, %v799
    %v807 = vmul.f32 %v794, %v803
    %v808 = vld [vmem:[%s6] sm:$0x3]
    %v810 = vlaneseq
    %v811 = vshrl.u32 %v810, 7
    %v812 = vsub.s32 0, %v811
    %v813 = vrot.slane %v808, %v812
    %v814 = vlaneseq
    %v815 = vshrl.u32 %v814, 7
    %v816 = vsub.s32 1, %v815
    %v817 = vrot.slane %v808, %v816
    %v820 = vadd.f32 %v806, %v813
    %v821 = vadd.f32 %v807, %v817
    %v822 = vmax.f32 %v820, 0.0
    %v823 = vmax.f32 %v821, 0.0
    %v824 = vld [vmem:[%s7] sm:$0xf]
    %v825 = vld [vmem:[%s7 + $0x4] sm:$0xf]
    %v826 = vld [vmem:[%s7 + $0x8] sm:$0xf]
    %v827 = vld [vmem:[%s7 + $0xc] sm:$0xf]
    %v828 = vld [vmem:[%s7 + $0x10] sm:$0xf]
    %v829 = vld [vmem:[%s7 + $0x14] sm:$0xf]
    %v830 = vld [vmem:[%s7 + $0x18] sm:$0xf]
    %v831 = vld [vmem:[%s7 + $0x1c] sm:$0xf]
    %v832 = vld [vmem:[%s7 + $0x20] sm:$0xf]
    %v833 = vld [vmem:[%s7 + $0x24] sm:$0xf]
    %v834 = vld [vmem:[%s7 + $0x28] sm:$0xf]
    %v835 = vld [vmem:[%s7 + $0x2c] sm:$0xf]
    %v836 = vld [vmem:[%s7 + $0x30] sm:$0xf]
    %v837 = vld [vmem:[%s7 + $0x34] sm:$0xf]
    %v838 = vld [vmem:[%s7 + $0x38] sm:$0xf]
    %v839 = vld [vmem:[%s7 + $0x3c] sm:$0xf]
    %v840 = vld [vmem:[%s7 + $0x40] sm:$0xf]
    %v841 = vld [vmem:[%s7 + $0x44] sm:$0xf]
    %v842 = vld [vmem:[%s7 + $0x48] sm:$0xf]
    %v843 = vld [vmem:[%s7 + $0x4c] sm:$0xf]
    %v844 = vld [vmem:[%s7 + $0x50] sm:$0xf]
    %v845 = vld [vmem:[%s7 + $0x54] sm:$0xf]
    %v846 = vld [vmem:[%s7 + $0x58] sm:$0xf]
    %v847 = vld [vmem:[%s7 + $0x5c] sm:$0xf]
    %v848 = vld [vmem:[%s7 + $0x60] sm:$0xf]
    %v849 = vld [vmem:[%s7 + $0x64] sm:$0xf]
    %v850 = vld [vmem:[%s7 + $0x68] sm:$0xf]
    %v851 = vld [vmem:[%s7 + $0x6c] sm:$0xf]
    %v852 = vld [vmem:[%s7 + $0x70] sm:$0xf]
    %v853 = vld [vmem:[%s7 + $0x74] sm:$0xf]
    %v854 = vld [vmem:[%s7 + $0x78] sm:$0xf]
    %v855 = vld [vmem:[%s7 + $0x7c] sm:$0xf]
    %v856 = vunpack.c.l.bf16 %v824
    %v857 = vunpack.c.l.bf16 %v825
    %v858 = vunpack.c.l.bf16 %v826
    %v859 = vunpack.c.l.bf16 %v827
    %v860 = vunpack.c.l.bf16 %v828
    %v861 = vunpack.c.l.bf16 %v829
    %v862 = vunpack.c.l.bf16 %v830
    %v863 = vunpack.c.l.bf16 %v831
    %v864 = vunpack.c.l.bf16 %v832
    %v865 = vunpack.c.l.bf16 %v833
    %v866 = vunpack.c.l.bf16 %v834
    %v867 = vunpack.c.l.bf16 %v835
    %v868 = vunpack.c.l.bf16 %v836
    %v869 = vunpack.c.l.bf16 %v837
    %v870 = vunpack.c.l.bf16 %v838
    %v871 = vunpack.c.l.bf16 %v839
    %v872 = vunpack.c.l.bf16 %v840
    %v873 = vunpack.c.l.bf16 %v841
    %v874 = vunpack.c.l.bf16 %v842
    %v875 = vunpack.c.l.bf16 %v843
    %v876 = vunpack.c.l.bf16 %v844
    %v877 = vunpack.c.l.bf16 %v845
    %v878 = vunpack.c.l.bf16 %v846
    %v879 = vunpack.c.l.bf16 %v847
    %v880 = vunpack.c.l.bf16 %v848
    %v881 = vunpack.c.l.bf16 %v849
    %v882 = vunpack.c.l.bf16 %v850
    %v883 = vunpack.c.l.bf16 %v851
    %v884 = vunpack.c.l.bf16 %v852
    %v885 = vunpack.c.l.bf16 %v853
    %v886 = vunpack.c.l.bf16 %v854
    %v887 = vunpack.c.l.bf16 %v855
    %888 = vmatprep.subr.mxu0 0.0
    %889 = vmatpush1.msra.mxu0 %v856
    %890 = vmatprep.subr.mxu0 0.0
    %891 = vmatpush1.msra.mxu0 %v857
    %892 = vmatprep.subr.mxu0 0.0
    %893 = vmatpush1.msra.mxu0 %v858
    %894 = vmatprep.subr.mxu0 0.0
    %895 = vmatpush1.msra.mxu0 %v859
    %896 = vmatprep.subr.mxu0 0.0
    %897 = vmatpush1.msra.mxu0 %v860
    %898 = vmatprep.subr.mxu0 0.0
    %899 = vmatpush1.msra.mxu0 %v861
    %900 = vmatprep.subr.mxu0 0.0
    %901 = vmatpush1.msra.mxu0 %v862
    %902 = vmatprep.subr.mxu0 0.0
    %903 = vmatpush1.msra.mxu0 %v863
    %904 = vmatprep.subr.mxu0 0.0
    %905 = vmatpush1.msra.mxu0 %v864
    %906 = vmatprep.subr.mxu0 0.0
    %907 = vmatpush1.msra.mxu0 %v865
    %908 = vmatprep.subr.mxu0 0.0
    %909 = vmatpush1.msra.mxu0 %v866
    %910 = vmatprep.subr.mxu0 0.0
    %911 = vmatpush1.msra.mxu0 %v867
    %912 = vmatprep.subr.mxu0 0.0
    %913 = vmatpush1.msra.mxu0 %v868
    %914 = vmatprep.subr.mxu0 0.0
    %915 = vmatpush1.msra.mxu0 %v869
    %916 = vmatprep.subr.mxu0 0.0
    %917 = vmatpush1.msra.mxu0 %v870
    %918 = vmatprep.subr.mxu0 0.0
    %919 = vmatpush1.msra.mxu0 %v871
    %920 = vmatprep.subr.mxu0 0.0
    %921 = vmatpush1.msra.mxu0 %v872
    %922 = vmatprep.subr.mxu0 0.0
    %923 = vmatpush1.msra.mxu0 %v873
    %924 = vmatprep.subr.mxu0 0.0
    %925 = vmatpush1.msra.mxu0 %v874
    %926 = vmatprep.subr.mxu0 0.0
    %927 = vmatpush1.msra.mxu0 %v875
    %928 = vmatprep.subr.mxu0 0.0
    %929 = vmatpush1.msra.mxu0 %v876
    %930 = vmatprep.subr.mxu0 0.0
    %931 = vmatpush1.msra.mxu0 %v877
    %932 = vmatprep.subr.mxu0 0.0
    %933 = vmatpush1.msra.mxu0 %v878
    %934 = vmatprep.subr.mxu0 0.0
    %935 = vmatpush1.msra.mxu0 %v879
    %936 = vmatprep.subr.mxu0 0.0
    %937 = vmatpush1.msra.mxu0 %v880
    %938 = vmatprep.subr.mxu0 0.0
    %939 = vmatpush1.msra.mxu0 %v881
    %940 = vmatprep.subr.mxu0 0.0
    %941 = vmatpush1.msra.mxu0 %v882
    %942 = vmatprep.subr.mxu0 0.0
    %943 = vmatpush1.msra.mxu0 %v883
    %944 = vmatprep.subr.mxu0 0.0
    %945 = vmatpush1.msra.mxu0 %v884
    %946 = vmatprep.subr.mxu0 0.0
    %947 = vmatpush1.msra.mxu0 %v885
    %948 = vmatprep.subr.mxu0 0.0
    %949 = vmatpush1.msra.mxu0 %v886
    %950 = vmatprep.subr.mxu0 0.0
    %951 = vmatpush1.msra.mxu0 %v887
    %952 = vmatprep.mubr.f32.mxu0 %v823
    %953 = vmatmul.mubr.f32.gmra.mrb[0].mxu0 %v822
    %v954 = vpop.f32.mrb[0].mxu0
    %v955 = vadd.f32 0.0, %v954
    %v956 = vpop.f32.mrb[0].mxu0
    %957 = vdwg.mxu0
    %vm958 = vcmask 523264
    %v959 = vsel %vm958, %v955, 0.0
    %v960 = vrot.slane %v959, 4
    %v961 = vadd.f32 %v959, %v960
    %v962 = vrot.slane %v961, 2
    %v963 = vadd.f32 %v961, %v962
    %v964 = vrot.slane %v963, 1
    %v965 = vadd.f32 %v963, %v964
    %v966 = vmul.f32 %v965, %v252
    %v967 = vmul.f32 %v955, %v955
    %v968 = vsel %vm958, %v967, 0.0
    %v969 = vrot.slane %v968, 4
    %v970 = vadd.f32 %v968, %v969
    %v971 = vrot.slane %v970, 2
    %v972 = vadd.f32 %v970, %v971
    %v973 = vrot.slane %v972, 1
    %v974 = vadd.f32 %v972, %v973
    %v975 = vmul.f32 %v974, %v252
    %v976 = vmul.f32 %v966, %v966
    %v977 = vsub.f32 %v975, %v976
    %v978 = vmax.f32 %v977, 0.0
    %v979 = vld [vmem:[%s8] sm:$0x1]
    %v980 = vadd.f32 %v978, 1e-05
    %v981 = vrsqrt.pop %v980
    %v982 = vmul.f32 %v979, %v981
    %v983 = vsub.f32 %v955, %v966
    %v985 = vlaneseq
    %v986 = vshrl.u32 %v985, 7
    %v987 = vsub.s32 0, %v986
    %v988 = vrot.slane %v982, %v987
    %v990 = vmul.f32 %v983, %v988
    %v991 = vld [vmem:[%s9] sm:$0x1]
    %v993 = vlaneseq
    %v994 = vshrl.u32 %v993, 7
    %v995 = vsub.s32 0, %v994
    %v996 = vrot.slane %v991, %v995
    %v998 = vadd.f32 %v990, %v996
    %v999 = vmax.f32 %v998, 0.0
    %v1000 = vld [vmem:[%s10] sm:$0x1]
    %v1002 = vlaneseq
    %v1003 = vshrl.u32 %v1002, 7
    %v1004 = vsub.s32 0, %v1003
    %v1005 = vrot.slane %v1000, %v1004
    %v1007 = vmul.f32 %v999, %v1005
    %v1008 = vsel %vm958, %v1007, 0.0
    %1009 = vadd.xlane.f32.xlu0 %v1008
    %v1010 = vpop.xlane.xlu0 %1009
    %v1011 = vld [vmem:[#allocation2] sm:$0x1]
    %v1013 = vlaneseq
    %v1014 = vshrl.u32 %v1013, 7
    %v1015 = vsub.s32 0, %v1014
    %v1016 = vrot.slane %v1011, %v1015
    %v1018 = vadd.f32 %v1010, %v1016
    %v1019 = vtanh.pop %v1018
    %vm1020 = vcmask 7168
    %1021 = vst.msk [vmem:[%s12] sm:$0xff] %vm1020, %v1019
    // Predicated region
    $region54: #{reward_forward.1} parent=1 // pred_check
      _
    $region55: #{reward_forward.1} parent=1 // pred_check_branch
      %1023 = sbr.rel (0) target = $region57
    $region56: #{reward_forward.1} parent=1 // pred_region
      _
    $region57: #{reward_forward.1} parent=1 // pred_fallthru
      _
    // Predicated region
    $region58: #{reward_forward.1} parent=1 // pred_check
      _
    $region59: #{reward_forward.1} parent=1 // pred_check_branch
      %1025 = sbr.rel (0) target = $region61
    $region60: #{reward_forward.1} parent=1 // pred_region
      _
    $region61: #{reward_forward.1} parent=1 // pred_fallthru
      _
    %1026 = vsyncpa [#allocation4], 1

</llo_original>
